<compile_context>
chip_gen: v6e
topology: v6e:2x2x1
jax: 0.10.0
libtpu: 0.0.40
codegen_flags: <defaults>
</compile_context>

<pallas_src>
import functools

import jax
import jax.numpy as jnp
from jax.experimental import pallas as pl
from jax.experimental.pallas import tpu as pltpu


def _round_up(a, b):
    return (a + b - 1) // b * b


def _chip_config():
    """Per-generation tile defaults / VMEM limits (falls back to conservative values)."""
    kind = ""
    try:
        kind = jax.devices()[0].device_kind.lower()
    except Exception:  # pragma: no cover - defensive
        pass
    if "v5 lite" in kind or "v5e" in kind or "v5litepod" in kind:
        return dict(tm=512, th=512, lane=128, vmem_limit=64 * 1024 * 1024)
    if "v6" in kind:  # v6e / Trillium
        return dict(tm=1024, th=512, lane=256, vmem_limit=96 * 1024 * 1024)
    if "v7" in kind or "tpu7" in kind:  # v7x: only 64 MiB physical VMEM per TC
        return dict(tm=640, th=512, lane=256, vmem_limit=56 * 1024 * 1024)
    return dict(tm=512, th=512, lane=128, vmem_limit=None)


def _pick_tile(total, target, align=128):
    """Largest multiple of `align` that divides `total` and is <= max(target, align)."""
    best = align
    d = align
    limit = min(max(target, align), total)
    while d <= limit:
        if total % d == 0:
            best = d
        d += align
    return best


def _vmem_usage(tm, th, dim_p, ce, oe):
    """Rough per-step VMEM bytes: double-buffered x/W1/W2/out + f32 acc + f32 h temp."""
    return (2 * tm * dim_p * ce        # x tiles
            + 2 * dim_p * th * ce      # W1 tiles
            + 2 * th * dim_p * ce      # W2 tiles
            + 2 * tm * dim_p * oe      # out tiles
            + tm * dim_p * 4           # f32 accumulator scratch
            + 2 * tm * th * 4)         # f32 h intermediate (+ GELU temp)


def _ffn_kernel(x_ref, w1_ref, b1_ref, w2_ref, b2_ref, o_ref, acc_ref, *, exact_gelu):
    # x_ref:  (tm, dim_p)      compute dtype
    # w1_ref: (dim_p, th)      compute dtype (streamed over hidden tiles, or resident)
    # b1_ref: (1, th)          f32
    # w2_ref: (th, dim_p)      compute dtype
    # b2_ref: (1, dim_p)       f32
    # o_ref:  (tm, dim_p)      output dtype (same block across all hidden tiles)
    # acc_ref:(tm, dim_p)      f32 accumulator scratch
    j = pl.program_id(1)

    @pl.when(j == 0)
    def _init():
        acc_ref[...] = jnp.zeros_like(acc_ref)

    # Linear 1 (partial over this hidden tile), f32 accumulation on the MXU.
    h = jnp.dot(x_ref[...], w1_ref[...], preferred_element_type=jnp.float32)
    h = h + b1_ref[...]  # bias kept in f32

    if exact_gelu:
        # Exact GELU (matches torch nn.GELU default, approximate='none'); f32 VALU erf.
        h = 0.5 * h * (1.0 + jax.lax.erf(h * 0.7071067811865476))
    else:
        # Tanh-approximate GELU: routes through the EUP slot instead of a long erf
        # polynomial on the VALU (use when the model tolerates the approximation).
        c = 0.7978845608028654  # sqrt(2/pi)
        h = 0.5 * h * (1.0 + jnp.tanh(c * (h + 0.044715 * h * h * h)))

    # Dropout(p=0.0) is the identity.

    # Linear 2: accumulate this hidden tile's contribution in f32.
    acc_ref[...] += jnp.dot(
        h.astype(w2_ref.dtype), w2_ref[...], preferred_element_type=jnp.float32
    )

    @pl.when(j == pl.num_programs(1) - 1)
    def _finalize():
        o_ref[...] = (acc_ref[...] + b2_ref[...]).astype(o_ref.dtype)


@functools.partial(
    jax.jit, static_argnames=("tm", "th", "compute_dtype", "exact_gelu")
)
def feed_forward(x, w1, b1, w2, b2, *, tm=None, th=None, compute_dtype=None,
                 exact_gelu=True):
    """Fused FFN.

    x : (M, dim)          activations (token-major; B*S rows)
    w1: (dim, hidden)     first Linear weight (transpose of torch Linear.weight)
    b1: (hidden,) or (1, hidden)
    w2: (hidden, dim)     second Linear weight
    b2: (dim,) or (1, dim)
    tm/th: row / hidden tile sizes; None -> chip-aware defaults.
    """
    M, dim = x.shape
    hidden = w1.shape[1]
    out_dtype = x.dtype
    cdt = jnp.dtype(compute_dtype) if compute_dtype is not None else jnp.dtype(x.dtype)
    ce = cdt.itemsize
    oe = jnp.dtype(out_dtype).itemsize
    sub = 8 if ce >= 4 else (16 if ce == 2 else 32)   # sublane packing multiple

    cfg = _chip_config()
    lane = cfg["lane"]
    vmem_limit = cfg["vmem_limit"]
    tm_req = cfg["tm"] if tm is None else tm
    th_req = cfg["th"] if th is None else th

    b1 = b1.reshape(1, hidden)
    b2 = b2.reshape(1, dim)

    # ---- padded logical shapes (lane-aligned; 256 on v6e/v7x, 128 otherwise) ----
    dim_p = _round_up(dim, lane)
    hid_p = _round_up(hidden, lane)
    tm_req = min(tm_req, _round_up(M, sub))           # clamp row tile for small M
    tm_req = max(sub, (tm_req // sub) * sub)

    budget = int((vmem_limit if vmem_limit is not None else 24 * 1024 * 1024) * 0.9)

    # ---- tile selection: prefer weight residency, else stream exact-divisor tiles ----
    if th is None and _vmem_usage(tm_req, hid_p, dim_p, ce, oe) <= budget:
        th_eff = hid_p                                 # weights DMA'd once, stay resident
        tm_eff = tm_req
    else:
        th_eff = hid_p if hid_p <= th_req else _pick_tile(hid_p, th_req)
        tm_eff = tm_req
        while _vmem_usage(tm_eff, th_eff, dim_p, ce, oe) > budget and tm_eff > sub:
            tm_eff = max(sub, (tm_eff // 2) // sub * sub)
        while _vmem_usage(tm_eff, th_eff, dim_p, ce, oe) > budget and th_eff > 128:
            new_th = _pick_tile(hid_p, max(128, th_eff // 2))
            if new_th == th_eff:
                break
            th_eff = new_th

    M_p = _round_up(M, tm_eff)
    grid = (M_p // tm_eff, hid_p // th_eff)

    # ---- pad / cast only when needed (static checks; aligned shapes are zero-copy) ----
    def _prep(a, shape, dtype, rows, cols):
        if a.shape == shape:
            return a if a.dtype == dtype else a.astype(dtype)
        return jnp.zeros(shape, dtype).at[:rows, :cols].set(a.astype(dtype))

    x_p = _prep(x, (M_p, dim_p), cdt, M, dim)
    w1_p = _prep(w1, (dim_p, hid_p), cdt, dim, hidden)
    w2_p = _prep(w2, (hid_p, dim_p), cdt, hidden, dim)
    b1_p = _prep(b1, (1, hid_p), jnp.float32, 1, hidden)
    b2_p = _prep(b2, (1, dim_p), jnp.float32, 1, dim)

    # ---- cost estimate (helps XLA schedule surrounding ops) ----
    weight_bytes = 2 * dim_p * hid_p * ce * (grid[0] if grid[1] > 1 else 1)
    cost = pl.CostEstimate(
        flops=4 * M_p * dim_p * hid_p,
        transcendentals=M_p * hid_p,
        bytes_accessed=M_p * dim_p * (ce + oe) + weight_bytes + (hid_p + dim_p) * 4,
    )

    out_p = pl.pallas_call(
        functools.partial(_ffn_kernel, exact_gelu=exact_gelu),
        out_shape=jax.ShapeDtypeStruct((M_p, dim_p), out_dtype),
        grid_spec=pltpu.PrefetchScalarGridSpec(
            num_scalar_prefetch=0,
            grid=grid,
            in_specs=[
                pl.BlockSpec((tm_eff, dim_p), lambda i, j: (i, 0)),   # x row tile
                pl.BlockSpec((dim_p, th_eff), lambda i, j: (0, j)),   # W1 hidden tile
                pl.BlockSpec((1, th_eff), lambda i, j: (0, j)),       # b1 tile
                pl.BlockSpec((th_eff, dim_p), lambda i, j: (j, 0)),   # W2 hidden tile
                pl.BlockSpec((1, dim_p), lambda i, j: (0, 0)),        # b2
            ],
            out_specs=pl.BlockSpec((tm_eff, dim_p), lambda i, j: (i, 0)),
            scratch_shapes=[pltpu.VMEM((tm_eff, dim_p), jnp.float32)],
        ),
        compiler_params=pltpu.CompilerParams(
            # M axis independent -> megacore-shardable; hidden axis is a reduction.
            dimension_semantics=("parallel", "arbitrary"),
            vmem_limit_bytes=vmem_limit,
        ),
        cost_estimate=cost,
    )(x_p, w1_p, b1_p, w2_p, b2_p)

    if M_p == M and dim_p == dim:
        return out_p
    return out_p[:M, :dim]


def init_params(key, dim, hidden_dim, dtype=jnp.float32):
    """Deterministic init mimicking PyTorch Linear's U(-1/sqrt(fan_in), 1/sqrt(fan_in))."""
    k1, k2, k3, k4 = jax.random.split(key, 4)
    lim1 = 1.0 / jnp.sqrt(dim)
    lim2 = 1.0 / jnp.sqrt(hidden_dim)
    w1 = jax.random.uniform(k1, (dim, hidden_dim), dtype, -lim1, lim1)
    b1 = jax.random.uniform(k2, (1, hidden_dim), dtype, -lim1, lim1)
    w2 = jax.random.uniform(k3, (hidden_dim, dim), dtype, -lim2, lim2)
    b2 = jax.random.uniform(k4, (1, dim), dtype, -lim2, lim2)
    return w1, b1, w2, b2


def reference(x, w1, b1, w2, b2):
    h = x @ w1 + b1
    h = jax.nn.gelu(h, approximate=False)
    return h @ w2 + b2


if __name__ == "__main__":
    key = jax.random.PRNGKey(0)
    kx, kp, kx2, kp2 = jax.random.split(key, 4)

    # --- Test 1: module-sized small shape (single hidden tile / weight-resident path) ---
    batch, seq, dim, hidden_dim = 2, 8, 32, 64
    x_bsd = jax.random.normal(kx, (batch, seq, dim), jnp.float32)
    w1, b1, w2, b2 = init_params(kp, dim, hidden_dim)

    x2d = x_bsd.reshape(batch * seq, dim)     # [B, S, dim] -> [M, dim]
    ref = reference(x2d, w1, b1, w2, b2)

    out_f32 = feed_forward(x2d, w1, b1, w2, b2)
    jax.block_until_ready(out_f32)
    assert jnp.allclose(out_f32, ref, atol=1e-5, rtol=1e-5), "f32 mismatch vs reference"

    # bf16 compute path (f32 MXU accumulation); ~1e-2-level deviation vs f32 is expected.
    out_bf16 = feed_forward(x2d, w1, b1, w2, b2, compute_dtype=jnp.bfloat16)
    jax.block_until_ready(out_bf16)
    assert jnp.allclose(out_bf16, ref, atol=5e-2, rtol=5e-2), "bf16 mismatch vs reference"

    _ = out_f32.reshape(batch, seq, dim)      # back to [B, S, dim]

    # --- Test 2: non-aligned dims + hidden streaming + multiple row tiles ---
    M2, dim2, hid2 = 40, 48, 200
    x2 = jax.random.normal(kx2, (M2, dim2), jnp.float32)
    w1b, b1b, w2b, b2b = init_params(kp2, dim2, hid2)
    ref2 = reference(x2, w1b, b1b, w2b, b2b)
    out2 = feed_forward(x2, w1b, b1b, w2b, b2b, tm=16, th=128)   # forces 2+ hidden tiles
    jax.block_until_ready(out2)
    assert jnp.allclose(out2, ref2, atol=1e-4, rtol=1e-4), "streamed/padded path mismatch"

    # Tanh-approx GELU path (looser tolerance: different GELU formulation).
    out3 = feed_forward(x2, w1b, b1b, w2b, b2b, tm=16, th=128, exact_gelu=False)
    jax.block_until_ready(out3)
    assert jnp.allclose(out3, ref2, atol=5e-2, rtol=5e-2), "tanh-GELU path mismatch"

    print("KERNEL_OK")
</pallas_src>

<mosaic_0001>
module attributes {stable_mosaic.version = 11 : i64} {
  func.func @_ffn_kernel(%arg0: i32, %arg1: i32, %arg2: memref<16x128xf32, #tpu.memory_space<vmem>>, %arg3: memref<128x128xf32, #tpu.memory_space<vmem>>, %arg4: memref<1x128xf32, #tpu.memory_space<vmem>>, %arg5: memref<128x128xf32, #tpu.memory_space<vmem>>, %arg6: memref<1x128xf32, #tpu.memory_space<vmem>>, %arg7: memref<16x128xf32, #tpu.memory_space<vmem>>, %arg8: memref<16x128xf32, #tpu.memory_space<vmem>>) attributes {dimension_semantics = [#tpu.dimension_semantics<parallel>, #tpu.dimension_semantics<arbitrary>], iteration_bounds = array<i64: 1, 1>, scalar_prefetch = 0 : i64, scratch_operands = 1 : i64, tpu.core_type = #tpu.core_type<tc>, window_params = [{transform_indices = @transform_0, window_bounds = array<i64: 16, 128>}, {transform_indices = @transform_1, window_bounds = array<i64: 128, 128>}, {transform_indices = @transform_2, window_bounds = array<i64: 1, 128>}, {transform_indices = @transform_3, window_bounds = array<i64: 128, 128>}, {pipeline_mode = #tpu.pipeline_mode<synchronous>, transform_indices = @transform_4, window_bounds = array<i64: 1, 128>}, {transform_indices = @transform_5, window_bounds = array<i64: 16, 128>}]} {
    %c0_i32 = arith.constant 0 : i32
    %0 = arith.cmpi eq, %arg1, %c0_i32 : i32
    %1 = arith.extui %0 : i1 to i32
    %c0_i32_0 = arith.constant 0 : i32
    %2 = arith.cmpi ne, %1, %c0_i32_0 : i32
    scf.if %2 {
      %cst_18 = arith.constant 0.000000e+00 : f32
      %25 = vector.broadcast %cst_18 : f32 to vector<16x128xf32>
      %c0_19 = arith.constant 0 : index
      %c0_20 = arith.constant 0 : index
      %26 = vector.load %arg8[%c0_19, %c0_20] : memref<16x128xf32, #tpu.memory_space<vmem>>, vector<16x128xf32>
      tpu.vector_store %arg8[%c0_19, %c0_20], %25 {strides = array<i32>} : memref<16x128xf32, #tpu.memory_space<vmem>>, vector<16x128xf32>,
    } else {
    }
    %c0 = arith.constant 0 : index
    %c0_1 = arith.constant 0 : index
    %3 = vector.load %arg2[%c0, %c0_1] : memref<16x128xf32, #tpu.memory_space<vmem>>, vector<16x128xf32>
    %c0_2 = arith.constant 0 : index
    %c0_3 = arith.constant 0 : index
    %4 = vector.load %arg3[%c0_2, %c0_3] : memref<128x128xf32, #tpu.memory_space<vmem>>, vector<128x128xf32>
    %cst = arith.constant dense<0.000000e+00> : vector<16x128xf32>
    %5 = tpu.matmul %3, %4, %cst {dimension_numbers = #tpu.dot_dimension_numbers<[1], [0], [0], [1], [0, 0, 1, 1], [], []>} : vector<16x128xf32>, vector<128x128xf32>, vector<16x128xf32> -> vector<16x128xf32>
    %c0_4 = arith.constant 0 : index
    %c0_5 = arith.constant 0 : index
    %6 = vector.load %arg4[%c0_4, %c0_5] : memref<1x128xf32, #tpu.memory_space<vmem>>, vector<1x128xf32>
    %7 = vector.broadcast %6 : vector<1x128xf32> to vector<16x128xf32>
    %8 = arith.addf %5, %7 : vector<16x128xf32>
    %cst_6 = arith.constant 5.000000e-01 : f32
    %9 = vector.broadcast %cst_6 : f32 to vector<16x128xf32>
    %10 = arith.mulf %9, %8 : vector<16x128xf32>
    %cst_7 = arith.constant 0.707106769 : f32
    %11 = vector.broadcast %cst_7 : f32 to vector<16x128xf32>
    %12 = arith.mulf %8, %11 : vector<16x128xf32>
    %13 = math.erf %12 : vector<16x128xf32>
    %cst_8 = arith.constant 1.000000e+00 : f32
    %14 = vector.broadcast %cst_8 : f32 to vector<16x128xf32>
    %15 = arith.addf %14, %13 : vector<16x128xf32>
    %16 = arith.mulf %10, %15 : vector<16x128xf32>
    %c0_9 = arith.constant 0 : index
    %c0_10 = arith.constant 0 : index
    %17 = vector.load %arg8[%c0_9, %c0_10] : memref<16x128xf32, #tpu.memory_space<vmem>>, vector<16x128xf32>
    %c0_11 = arith.constant 0 : index
    %c0_12 = arith.constant 0 : index
    %18 = vector.load %arg5[%c0_11, %c0_12] : memref<128x128xf32, #tpu.memory_space<vmem>>, vector<128x128xf32>
    %cst_13 = arith.constant dense<0.000000e+00> : vector<16x128xf32>
    %19 = tpu.matmul %16, %18, %cst_13 {dimension_numbers = #tpu.dot_dimension_numbers<[1], [0], [0], [1], [0, 0, 1, 1], [], []>} : vector<16x128xf32>, vector<128x128xf32>, vector<16x128xf32> -> vector<16x128xf32>
    %20 = arith.addf %17, %19 : vector<16x128xf32>
    %c0_14 = arith.constant 0 : index
    %c0_15 = arith.constant 0 : index
    %21 = vector.load %arg8[%c0_14, %c0_15] : memref<16x128xf32, #tpu.memory_space<vmem>>, vector<16x128xf32>
    tpu.vector_store %arg8[%c0_14, %c0_15], %20 {strides = array<i32>} : memref<16x128xf32, #tpu.memory_space<vmem>>, vector<16x128xf32>,
    %c0_i32_16 = arith.constant 0 : i32
    %22 = arith.cmpi eq, %arg1, %c0_i32_16 : i32
    %23 = arith.extui %22 : i1 to i32
    %c0_i32_17 = arith.constant 0 : i32
    %24 = arith.cmpi ne, %23, %c0_i32_17 : i32
    scf.if %24 {
      %c0_18 = arith.constant 0 : index
      %c0_19 = arith.constant 0 : index
      %25 = vector.load %arg8[%c0_18, %c0_19] : memref<16x128xf32, #tpu.memory_space<vmem>>, vector<16x128xf32>
      %c0_20 = arith.constant 0 : index
      %c0_21 = arith.constant 0 : index
      %26 = vector.load %arg6[%c0_20, %c0_21] : memref<1x128xf32, #tpu.memory_space<vmem>>, vector<1x128xf32>
      %27 = vector.broadcast %26 : vector<1x128xf32> to vector<16x128xf32>
      %28 = arith.addf %25, %27 : vector<16x128xf32>
      %c0_22 = arith.constant 0 : index
      %c0_23 = arith.constant 0 : index
      %29 = vector.load %arg7[%c0_22, %c0_23] : memref<16x128xf32, #tpu.memory_space<vmem>>, vector<16x128xf32>
      tpu.vector_store %arg7[%c0_22, %c0_23], %28 {strides = array<i32>} : memref<16x128xf32, #tpu.memory_space<vmem>>, vector<16x128xf32>,
    } else {
    }
    return
  }
  func.func @transform_0(%arg0: i32, %arg1: i32) -> (i32, i32) {
    %c0_i32 = arith.constant 0 : i32
    %c0_i32_0 = arith.constant 0 : i32
    return %arg0, %c0_i32 : i32, i32
  }
  func.func @transform_1(%arg0: i32, %arg1: i32) -> (i32, i32) {
    %c0_i32 = arith.constant 0 : i32
    %c0_i32_0 = arith.constant 0 : i32
    return %c0_i32, %arg1 : i32, i32
  }
  func.func @transform_2(%arg0: i32, %arg1: i32) -> (i32, i32) {
    %c0_i32 = arith.constant 0 : i32
    %c0_i32_0 = arith.constant 0 : i32
    return %c0_i32, %arg1 : i32, i32
  }
  func.func @transform_3(%arg0: i32, %arg1: i32) -> (i32, i32) {
    %c0_i32 = arith.constant 0 : i32
    %c0_i32_0 = arith.constant 0 : i32
    return %arg1, %c0_i32 : i32, i32
  }
  func.func @transform_4(%arg0: i32, %arg1: i32) -> (i32, i32) {
    %c0_i32 = arith.constant 0 : i32
    %c0_i32_0 = arith.constant 0 : i32
    %c0_i32_1 = arith.constant 0 : i32
    return %c0_i32, %c0_i32_0 : i32, i32
  }
  func.func @transform_5(%arg0: i32, %arg1: i32) -> (i32, i32) {
    %c0_i32 = arith.constant 0 : i32
    %c0_i32_0 = arith.constant 0 : i32
    return %arg0, %c0_i32 : i32, i32
  }
}

</mosaic_0001>

<llo_original>
// kernel: feed_forward.1
$region0: #{feed_forward.1}
  #allocation0 [shape = 'u32[]', space=smem, size = 0x4, offset = 0x4, fixed_abs, tag = 'smem constant byte address 0x4 - core index']
  #allocation1 [shape = 'u32[144,128]{1,0:T(1,128)}', space=vmem, size = 0x12000, scoped, tag = 'internal scratch']
  #allocation2 [shape = 'f32[16,128]{1,0:T(8,128)}', space=vmem, size = 0x2000, scoped, tag = 'scratch operand']
  %s0 = inlined_call_operand.vmem [shape: f32[16,128], index: 0, kind: input, shape index: {}]
  %s1 = inlined_call_operand.vmem [shape: f32[128,128], index: 1, kind: input, shape index: {}]
  %s2 = inlined_call_operand.vmem [shape: f32[1,128], index: 2, kind: input, shape index: {}]
  %s3 = inlined_call_operand.vmem [shape: f32[128,128], index: 3, kind: input, shape index: {}]
  %s4 = inlined_call_operand.vmem [shape: f32[1,128], index: 4, kind: input, shape index: {}]
  %s5 = inlined_call_operand.hbm [shape: f32[16,128], index: 5, kind: output, shape index: {}]
  %s6 = sld [smem:[#allocation0]]
  $region38: #{feed_forward.1} parent=0
    _
  %s8 = ssub.s32 1, %s6
  %s9 = scalar_select 0, %s8, %s6
  $region1: #{feed_forward.1} parent=0
    #allocation3 [shape = 'u8[8192]{0}', space=vmem, size = 0x2000, scoped, tag = 'output window, operand 0, single buffered']
    #allocation4 [shape = 's32[1]{0}', space=sflag, size = 0x4, scoped, tag = 'scoped memory for feed_forward.1']
    %10 = vsyncpa [#allocation4], 0
    // Predicated region
    $region2: #{feed_forward.1} parent=1 // pred_check
      _
    $region3: #{feed_forward.1} parent=1 // pred_check_branch
      %12 = sbr.rel (0) target = $region5
    $region4: #{feed_forward.1} parent=1 // pred_region
      _
    $region5: #{feed_forward.1} parent=1 // pred_fallthru
      _
    // Predicated region
    $region6: #{feed_forward.1} parent=1 // pred_check
      _
    $region7: #{feed_forward.1} parent=1 // pred_check_branch
      %14 = sbr.rel (0) target = $region9
    $region8: #{feed_forward.1} parent=1 // pred_region
      _
    $region9: #{feed_forward.1} parent=1 // pred_fallthru
      _
    // Predicated region
    $region10: #{feed_forward.1} parent=1 // pred_check
      _
    $region11: #{feed_forward.1} parent=1 // pred_check_branch
      %16 = sbr.rel (0) target = $region13
    $region12: #{feed_forward.1} parent=1 // pred_region
      _
    $region13: #{feed_forward.1} parent=1 // pred_fallthru
      _
    // Predicated region
    $region14: #{feed_forward.1} parent=1 // pred_check
      _
    $region15: #{feed_forward.1} parent=1 // pred_check_branch
      %18 = sbr.rel (0) target = $region17
    $region16: #{feed_forward.1} parent=1 // pred_region
      _
    $region17: #{feed_forward.1} parent=1 // pred_fallthru
      _
    // Predicated region
    $region18: #{feed_forward.1} parent=1 // pred_check
      _
    $region19: #{feed_forward.1} parent=1 // pred_check_branch
      %20 = sbr.rel (0) target = $region21
    $region20: #{feed_forward.1} parent=1 // pred_region
      _
    $region21: #{feed_forward.1} parent=1 // pred_fallthru
      _
    %p21 = scmp.eq.s32.totalorder 0, 0
    // Predicated region
    $region22: #{feed_forward.1} parent=1 // pred_check
      %p22 = pneg %p21
    $region23: #{feed_forward.1} parent=1 // pred_check_branch
      %24 = sbr.rel (%p22) target = $region25
    $region24: #{feed_forward.1} parent=1 // pred_region
      %25 = vst [vmem:[#allocation2] sm:$0xff] 0.0
      %26 = vst [vmem:[#allocation2 + $0x8] sm:$0xff] 0.0
    $region25: #{feed_forward.1} parent=1 // pred_fallthru
      _
    %v27 = vld [vmem:[%s0] sm:$0xff]
    %v28 = vld [vmem:[%s0 + $0x8] sm:$0xff]
    %v29 = vld [vmem:[%s1] sm:$0xff]
    %v30 = vld [vmem:[%s1 + $0x8] sm:$0xff]
    %v31 = vld [vmem:[%s1 + $0x10] sm:$0xff]
    %v32 = vld [vmem:[%s1 + $0x18] sm:$0xff]
    %v33 = vld [vmem:[%s1 + $0x20] sm:$0xff]
    %v34 = vld [vmem:[%s1 + $0x28] sm:$0xff]
    %v35 = vld [vmem:[%s1 + $0x30] sm:$0xff]
    %v36 = vld [vmem:[%s1 + $0x38] sm:$0xff]
    %v37 = vld [vmem:[%s1 + $0x40] sm:$0xff]
    %v38 = vld [vmem:[%s1 + $0x48] sm:$0xff]
    %v39 = vld [vmem:[%s1 + $0x50] sm:$0xff]
    %v40 = vld [vmem:[%s1 + $0x58] sm:$0xff]
    %v41 = vld [vmem:[%s1 + $0x60] sm:$0xff]
    %v42 = vld [vmem:[%s1 + $0x68] sm:$0xff]
    %v43 = vld [vmem:[%s1 + $0x70] sm:$0xff]
    %v44 = vld [vmem:[%s1 + $0x78] sm:$0xff]
    %v45 = vld [vmem:[%s2] sm:$0x1]
    %v47 = vlaneseq
    %v48 = vshrl.u32 %v47, 7
    %v49 = vsub.s32 0, %v48
    %v50 = vrot.slane %v45, %v49
    %52 = vmatprep.subr.mxu0 0.0
    %53 = vmatpush1.msra.mxu0 %v44
    %54 = vmatprep.subr.mxu0 0.0
    %55 = vmatpush1.msra.mxu0 %v43
    %56 = vmatprep.subr.mxu0 0.0
    %57 = vmatpush1.msra.mxu0 %v42
    %58 = vmatprep.subr.mxu0 0.0
    %59 = vmatpush1.msra.mxu0 %v41
    %60 = vmatprep.subr.mxu0 0.0
    %61 = vmatpush1.msra.mxu0 %v40
    %62 = vmatprep.subr.mxu0 0.0
    %63 = vmatpush1.msra.mxu0 %v39
    %64 = vmatprep.subr.mxu0 0.0
    %65 = vmatpush1.msra.mxu0 %v38
    %66 = vmatprep.subr.mxu0 0.0
    %67 = vmatpush1.msra.mxu0 %v37
    %68 = vmatprep.subr.mxu0 0.0
    %69 = vmatpush1.msra.mxu0 %v36
    %70 = vmatprep.subr.mxu0 0.0
    %71 = vmatpush1.msra.mxu0 %v35
    %72 = vmatprep.subr.mxu0 0.0
    %73 = vmatpush1.msra.mxu0 %v34
    %74 = vmatprep.subr.mxu0 0.0
    %75 = vmatpush1.msra.mxu0 %v33
    %76 = vmatprep.subr.mxu0 0.0
    %77 = vmatpush1.msra.mxu0 %v32
    %78 = vmatprep.subr.mxu0 0.0
    %79 = vmatpush1.msra.mxu0 %v31
    %80 = vmatprep.subr.mxu0 0.0
    %81 = vmatpush1.msra.mxu0 %v30
    %82 = vmatprep.subr.mxu0 0.0
    %83 = vmatpush1.msra.mxu0 %v29
    %84 = vmatprep.subr.mxu0 0.0
    %85 = vmatpush2.msra.mxu0 0.0
    %86 = vmatprep.subr.mxu0 0.0
    %87 = vmatpush2.msra.mxu0 0.0
    %88 = vmatprep.subr.mxu0 0.0
    %89 = vmatpush2.msra.mxu0 0.0
    %90 = vmatprep.subr.mxu0 0.0
    %91 = vmatpush2.msra.mxu0 0.0
    %92 = vmatprep.subr.mxu0 0.0
    %93 = vmatpush2.msra.mxu0 0.0
    %94 = vmatprep.subr.mxu0 0.0
    %95 = vmatpush2.msra.mxu0 0.0
    %96 = vmatprep.subr.mxu0 0.0
    %97 = vmatpush2.msra.mxu0 0.0
    %98 = vmatprep.subr.mxu0 0.0
    %99 = vmatpush2.msra.mxu0 0.0
    %100 = vmatprep.subr.mxu0 0.0
    %101 = vmatpush2.msra.mxu0 0.0
    %102 = vmatprep.subr.mxu0 0.0
    %103 = vmatpush2.msra.mxu0 0.0
    %104 = vmatprep.subr.mxu0 0.0
    %105 = vmatpush2.msra.mxu0 0.0
    %106 = vmatprep.subr.mxu0 0.0
    %107 = vmatpush2.msra.mxu0 0.0
    %108 = vmatprep.subr.mxu0 0.0
    %109 = vmatpush2.msra.mxu0 0.0
    %110 = vmatprep.subr.mxu0 0.0
    %111 = vmatpush2.msra.mxu0 0.0
    %112 = vmatprep.subr.mxu0 0.0
    %113 = vmatpush2.msra.mxu0 0.0
    %114 = vmatprep.subr.mxu0 0.0
    %115 = vmatpush2.msra.mxu0 0.0
    %116 = vmatprep.mubr.f32.mxu0 0.0
    %117 = vmatmul.mubr.f32.gmra.mxu0 %v27
    %v118 = vpop.f32.mrf.mxu0
    %v119 = vadd.f32 %v50, %v118
    %v120 = vpop.f32.mrf.mxu0
    %121 = vmatprep.mubr.f32.mxu0 0.0
    %122 = vmatmul.mubr.f32.gmra.mxu0 %v28
    %v123 = vpop.f32.mrf.mxu0
    %v124 = vadd.f32 %v50, %v123
    %v125 = vpop.f32.mrf.mxu0
    %126 = vdwg.mxu0
    %v127 = vmul.f32 %v119, 0.5
    %v128 = vmul.f32 %v124, 0.5
    %v129 = vmul.f32 %v119, 0.70710677
    %v130 = vmul.f32 %v124, 0.70710677
    %v131 = verf.f32.pop %v129
    %v132 = verf.f32.pop %v130
    %v133 = vadd.f32 %v131, 1.0
    %v134 = vadd.f32 %v132, 1.0
    %v135 = vmul.f32 %v127, %v133
    %v136 = vmul.f32 %v128, %v134
    %v137 = vld [vmem:[#allocation2] sm:$0xff]
    %v138 = vld [vmem:[#allocation2 + $0x8] sm:$0xff]
    %v139 = vld [vmem:[%s3] sm:$0xff]
    %v140 = vld [vmem:[%s3 + $0x8] sm:$0xff]
    %v141 = vld [vmem:[%s3 + $0x10] sm:$0xff]
    %v142 = vld [vmem:[%s3 + $0x18] sm:$0xff]
    %v143 = vld [vmem:[%s3 + $0x20] sm:$0xff]
    %v144 = vld [vmem:[%s3 + $0x28] sm:$0xff]
    %v145 = vld [vmem:[%s3 + $0x30] sm:$0xff]
    %v146 = vld [vmem:[%s3 + $0x38] sm:$0xff]
    %v147 = vld [vmem:[%s3 + $0x40] sm:$0xff]
    %v148 = vld [vmem:[%s3 + $0x48] sm:$0xff]
    %v149 = vld [vmem:[%s3 + $0x50] sm:$0xff]
    %v150 = vld [vmem:[%s3 + $0x58] sm:$0xff]
    %v151 = vld [vmem:[%s3 + $0x60] sm:$0xff]
    %v152 = vld [vmem:[%s3 + $0x68] sm:$0xff]
    %v153 = vld [vmem:[%s3 + $0x70] sm:$0xff]
    %v154 = vld [vmem:[%s3 + $0x78] sm:$0xff]
    %155 = vmatprep.subr.mxu0 0.0
    %156 = vmatpush1.msra.mxu0 %v154
    %157 = vmatprep.subr.mxu0 0.0
    %158 = vmatpush1.msra.mxu0 %v153
    %159 = vmatprep.subr.mxu0 0.0
    %160 = vmatpush1.msra.mxu0 %v152
    %161 = vmatprep.subr.mxu0 0.0
    %162 = vmatpush1.msra.mxu0 %v151
    %163 = vmatprep.subr.mxu0 0.0
    %164 = vmatpush1.msra.mxu0 %v150
    %165 = vmatprep.subr.mxu0 0.0
    %166 = vmatpush1.msra.mxu0 %v149
    %167 = vmatprep.subr.mxu0 0.0
    %168 = vmatpush1.msra.mxu0 %v148
    %169 = vmatprep.subr.mxu0 0.0
    %170 = vmatpush1.msra.mxu0 %v147
    %171 = vmatprep.subr.mxu0 0.0
    %172 = vmatpush1.msra.mxu0 %v146
    %173 = vmatprep.subr.mxu0 0.0
    %174 = vmatpush1.msra.mxu0 %v145
    %175 = vmatprep.subr.mxu0 0.0
    %176 = vmatpush1.msra.mxu0 %v144
    %177 = vmatprep.subr.mxu0 0.0
    %178 = vmatpush1.msra.mxu0 %v143
    %179 = vmatprep.subr.mxu0 0.0
    %180 = vmatpush1.msra.mxu0 %v142
    %181 = vmatprep.subr.mxu0 0.0
    %182 = vmatpush1.msra.mxu0 %v141
    %183 = vmatprep.subr.mxu0 0.0
    %184 = vmatpush1.msra.mxu0 %v140
    %185 = vmatprep.subr.mxu0 0.0
    %186 = vmatpush1.msra.mxu0 %v139
    %187 = vmatprep.subr.mxu0 0.0
    %188 = vmatpush2.msra.mxu0 0.0
    %189 = vmatprep.subr.mxu0 0.0
    %190 = vmatpush2.msra.mxu0 0.0
    %191 = vmatprep.subr.mxu0 0.0
    %192 = vmatpush2.msra.mxu0 0.0
    %193 = vmatprep.subr.mxu0 0.0
    %194 = vmatpush2.msra.mxu0 0.0
    %195 = vmatprep.subr.mxu0 0.0
    %196 = vmatpush2.msra.mxu0 0.0
    %197 = vmatprep.subr.mxu0 0.0
    %198 = vmatpush2.msra.mxu0 0.0
    %199 = vmatprep.subr.mxu0 0.0
    %200 = vmatpush2.msra.mxu0 0.0
    %201 = vmatprep.subr.mxu0 0.0
    %202 = vmatpush2.msra.mxu0 0.0
    %203 = vmatprep.subr.mxu0 0.0
    %204 = vmatpush2.msra.mxu0 0.0
    %205 = vmatprep.subr.mxu0 0.0
    %206 = vmatpush2.msra.mxu0 0.0
    %207 = vmatprep.subr.mxu0 0.0
    %208 = vmatpush2.msra.mxu0 0.0
    %209 = vmatprep.subr.mxu0 0.0
    %210 = vmatpush2.msra.mxu0 0.0
    %211 = vmatprep.subr.mxu0 0.0
    %212 = vmatpush2.msra.mxu0 0.0
    %213 = vmatprep.subr.mxu0 0.0
    %214 = vmatpush2.msra.mxu0 0.0
    %215 = vmatprep.subr.mxu0 0.0
    %216 = vmatpush2.msra.mxu0 0.0
    %217 = vmatprep.subr.mxu0 0.0
    %218 = vmatpush2.msra.mxu0 0.0
    %219 = vmatprep.mubr.f32.mxu0 0.0
    %220 = vmatmul.mubr.f32.gmra.mxu0 %v135
    %v221 = vpop.f32.mrf.mxu0
    %v222 = vadd.f32 0.0, %v221
    %v223 = vpop.f32.mrf.mxu0
    %224 = vmatprep.mubr.f32.mxu0 0.0
    %225 = vmatmul.mubr.f32.gmra.mxu0 %v136
    %v226 = vpop.f32.mrf.mxu0
    %v227 = vadd.f32 0.0, %v226
    %v228 = vpop.f32.mrf.mxu0
    %229 = vdwg.mxu0
    %v230 = vadd.f32 %v137, %v222
    %v231 = vadd.f32 %v138, %v227
    %232 = vst [vmem:[#allocation2] sm:$0xff] %v230
    %233 = vst [vmem:[#allocation2 + $0x8] sm:$0xff] %v231
    // Predicated region
    $region26: #{feed_forward.1} parent=1 // pred_check
      %p234 = pneg %p21
    $region27: #{feed_forward.1} parent=1 // pred_check_branch
      %236 = sbr.rel (%p234) target = $region29
    $region28: #{feed_forward.1} parent=1 // pred_region
      %v237 = vld [vmem:[#allocation2] sm:$0xff]
      %v238 = vld [vmem:[#allocation2 + $0x8] sm:$0xff]
      %v239 = vld [vmem:[%s4] sm:$0x1]
      %v241 = vlaneseq
      %v242 = vshrl.u32 %v241, 7
      %v243 = vsub.s32 0, %v242
      %v244 = vrot.slane %v239, %v243
      %v246 = vadd.f32 %v237, %v244
      %v247 = vadd.f32 %v238, %v244
      %248 = vst [vmem:[#allocation3] sm:$0xff] %v246
      %249 = vst [vmem:[#allocation3 + $0x8] sm:$0xff] %v247
    $region29: #{feed_forward.1} parent=1 // pred_fallthru
      _
    // Predicated region
    $region30: #{feed_forward.1} parent=1 // pred_check
      _
    $region31: #{feed_forward.1} parent=1 // pred_check_branch
      %251 = sbr.rel (0) target = $region33
    $region32: #{feed_forward.1} parent=1 // pred_region
      %s253 = ssub.s32 256, 256
      %254 = vsyncadd [#allocation4], %s253
      %s255 = sshll.u32 [#allocation3], 4
      %s256 = int_to_ptr.vmem [resolvable:$true] %s255
      %261 = dma.vmem_to_hbm [thread:$0]  %s256, 256, %s5, [#allocation4], 128, 128, 8
    $region33: #{feed_forward.1} parent=1 // pred_fallthru
      _
    // Predicated region
    $region34: #{feed_forward.1} parent=1 // pred_check
      _
    $region35: #{feed_forward.1} parent=1 // pred_check_branch
      %263 = sbr.rel (0) target = $region37
    $region36: #{feed_forward.1} parent=1 // pred_region
      %264 = dma.done [#allocation4], 256
    $region37: #{feed_forward.1} parent=1 // pred_fallthru
      _
    %265 = vsyncpa [#allocation4], 1

</llo_original>
